<compile_context>
chip_gen: v6e
topology: v6e:2x2x1
jax: 0.10.0
libtpu: 0.0.40
codegen_flags: <defaults>
</compile_context>

<pallas_src>
import functools

import jax
import jax.numpy as jnp
from jax.experimental import pallas as pl
from jax.experimental.pallas import tpu as pltpu


# Lane-tile cap (f32 columns per grid step).  Sweepable 2048..8192; at 4096 the
# per-step footprint (double-buffered (D,TM) in/out + (K,TM) intermediates) is
# ~6 MiB, comfortably inside the 32 MiB scoped VMEM requested below on all of
# v5e / v6e / v7x.  TODO(synk): raise vmem_limit_bytes before pushing >8192.
_TM_CAP = 4096
_VMEM_LIMIT = 32 * 1024 * 1024


def _vq_kernel(m_valid, n_inner, masked,
               x_ref, cb2_ref, cbt_ref, cbsq_ref,
               xd_ref, count_ref, err_ref):
    """One grid step quantizes a (D, TM) tile (tokens on lanes).

    x_ref:     (D, TM)   tokens on lanes, features on sublanes
    cb2_ref:   (K, D)    -2 * codebook             (resident every step)
    cbt_ref:   (D, K)    codebook^T for dequant    (resident)
    cbsq_ref:  (K, 1)    per-code squared norms    (hoisted to the wrapper)
    xd_ref:    (D, TM)   dequantized output tile
    count_ref: (1, K, 1) per-slice code counts     (resident accumulator)
    err_ref:   (1, 1, 1) per-slice squared-error   (resident accumulator)
    """
    i = pl.program_id(0)          # parallel slice (sample / megacore split)
    j = pl.program_id(1)          # inner chunk along the token axis

    @pl.when(j == 0)
    def _():
        count_ref[...] = jnp.zeros_like(count_ref)
        err_ref[...] = jnp.zeros_like(err_ref)

    x_t = x_ref[...].astype(jnp.float32)               # (D, TM)
    cb2 = cb2_ref[...]                                  # (K, D) = -2 * codebook
    cbt = cbt_ref[...]                                  # (D, K)
    cb_sq = cbsq_ref[...]                               # (K, 1)
    k = cb2.shape[0]
    tm = x_t.shape[1]

    # distance up to the per-column ||x||^2 term (constant per column, so it
    # does not change the argmin):  dist[k, c] = ||cb_k||^2 - 2 <cb_k, x_c>
    dist = cb_sq + jnp.dot(cb2, x_t, preferred_element_type=jnp.float32)  # (K, TM)

    # first-index-wins argmin over the code (sublane) axis
    min_val = jnp.min(dist, axis=0, keepdims=True)                 # (1, TM)
    iota_k = jax.lax.broadcasted_iota(jnp.int32, (k, 1), 0)        # (K, 1)
    masked_idx = jnp.where(dist <= min_val, iota_k, k)             # (K, TM)
    code_idx = jnp.min(masked_idx, axis=0, keepdims=True)          # (1, TM)
    onehot = (iota_k == code_idx).astype(jnp.float32)              # (K, TM)

    # dequantize on the MXU: x_d = cb^T @ onehot  -> lane-dense store
    xd_t = jnp.dot(cbt, onehot, preferred_element_type=jnp.float32)  # (D, TM)
    xd_ref[...] = xd_t.astype(xd_ref.dtype)

    diff = x_t - xd_t
    if masked:
        # Cold path only: the transposed fallback pads the token axis; mask
        # padded columns out of the statistics (their xd columns are sliced
        # off in the wrapper).  The hot (native) path never pads, so full
        # tiles carry no mask work at all.
        base = (i * n_inner + j) * tm
        col = base + jax.lax.broadcasted_iota(jnp.int32, (1, tm), 1)
        valid = (col < m_valid).astype(jnp.float32)                # (1, TM)
        onehot = onehot * valid
        diff = diff * valid

    # small in-step reductions, accumulated into resident output blocks
    count_ref[...] += jnp.sum(onehot, axis=-1, keepdims=True).reshape(1, k, 1)
    err_ref[...] += jnp.sum(diff * diff).reshape(1, 1, 1)


def _native_t_tile(t):
    """Largest legal token tile for the native (N, D, T) layout, or None."""
    if t <= _TM_CAP:
        return t                       # a full-extent last dim is always legal
    c = (_TM_CAP // 128) * 128
    while c >= 128:
        if t % c == 0:                 # must divide T so no tile is partial
            return c
        c -= 128
    return None


@jax.jit
def quantize_ema_forward(x, codebook):
    """Eval-mode forward of QuantizeEMA.

    x:        (N, code_dim, T)    (PyTorch NCT conv layout)
    codebook: (nb_code, code_dim)
    returns:  (x_d (N, code_dim, T), commit_loss scalar, perplexity scalar)
    """
    n, c, t = x.shape
    k, d = codebook.shape
    assert c == d
    m = n * t

    cb = codebook.astype(jnp.float32)
    cb2 = -2.0 * cb                                        # fold -2 once, on (K,D)
    cbt = cb.T                                             # (D, K) for dequant
    cb_sq = jnp.sum(cb * cb, axis=-1, keepdims=True)       # (K, 1), hoisted

    t_tile = _native_t_tile(t)

    if t >= 128 and t_tile is not None:
        # ---- hot path: native (N, D, T) layout, zero wrapper transposes ----
        n_inner = t // t_tile
        kernel = functools.partial(_vq_kernel, m, n_inner, False)
        x_d, count_p, err_p = pl.pallas_call(
            kernel,
            out_shape=(
                jax.ShapeDtypeStruct((n, d, t), x.dtype),
                jax.ShapeDtypeStruct((n, k, 1), jnp.float32),
                jax.ShapeDtypeStruct((n, 1, 1), jnp.float32),
            ),
            grid_spec=pltpu.PrefetchScalarGridSpec(
                num_scalar_prefetch=0,
                grid=(n, n_inner),
                in_specs=[
                    pl.BlockSpec((None, d, t_tile), lambda i, j: (i, 0, j)),
                    pl.BlockSpec((k, d), lambda i, j: (0, 0)),
                    pl.BlockSpec((d, k), lambda i, j: (0, 0)),
                    pl.BlockSpec((k, 1), lambda i, j: (0, 0)),
                ],
                out_specs=[
                    pl.BlockSpec((None, d, t_tile), lambda i, j: (i, 0, j)),
                    pl.BlockSpec((1, k, 1), lambda i, j: (i, 0, 0)),
                    pl.BlockSpec((1, 1, 1), lambda i, j: (i, 0, 0)),
                ],
            ),
            compiler_params=pltpu.CompilerParams(
                dimension_semantics=("parallel", "arbitrary"),
                vmem_limit_bytes=_VMEM_LIMIT),
        )(x, cb2, cbt, cb_sq)
        code_count = jnp.sum(count_p[:, :, 0], axis=0)       # (K,)
        err_sum = jnp.sum(err_p)
    else:
        # ---- fallback: tiny / awkward T -> transposed (D, M) layout ----
        x_t = jnp.transpose(x, (1, 0, 2)).reshape(d, m).astype(jnp.float32)
        if m <= _TM_CAP:
            tm, n_tiles, m_pad = m, 1, m
        else:
            tm = _TM_CAP
            n_tiles = -(-m // tm)
            m_pad = n_tiles * tm
            if m_pad > m:
                x_t = jnp.pad(x_t, ((0, 0), (0, m_pad - m)))
        kernel = functools.partial(_vq_kernel, m, n_tiles, m_pad != m)
        xdt_pad, count_p, err_p = pl.pallas_call(
            kernel,
            out_shape=(
                jax.ShapeDtypeStruct((d, m_pad), x.dtype),
                jax.ShapeDtypeStruct((1, k, 1), jnp.float32),
                jax.ShapeDtypeStruct((1, 1, 1), jnp.float32),
            ),
            grid_spec=pltpu.PrefetchScalarGridSpec(
                num_scalar_prefetch=0,
                grid=(1, n_tiles),
                in_specs=[
                    pl.BlockSpec((d, tm), lambda i, j: (0, j)),
                    pl.BlockSpec((k, d), lambda i, j: (0, 0)),
                    pl.BlockSpec((d, k), lambda i, j: (0, 0)),
                    pl.BlockSpec((k, 1), lambda i, j: (0, 0)),
                ],
                out_specs=[
                    pl.BlockSpec((d, tm), lambda i, j: (0, j)),
                    pl.BlockSpec((1, k, 1), lambda i, j: (0, 0, 0)),
                    pl.BlockSpec((1, 1, 1), lambda i, j: (0, 0, 0)),
                ],
            ),
            compiler_params=pltpu.CompilerParams(
                dimension_semantics=("arbitrary", "arbitrary"),
                vmem_limit_bytes=_VMEM_LIMIT),
        )(x_t, cb2, cbt, cb_sq)
        code_count = count_p[0, :, 0]
        err_sum = err_p[0, 0, 0]
        xd_t = xdt_pad[:, :m]                                 # drop padded cols
        x_d = jnp.transpose(xd_t.reshape(d, n, t), (1, 0, 2))

    # commit_loss = F.mse_loss(x, x_d.detach())
    commit_loss = err_sum / jnp.float32(m * d)

    # perplexity (compute_perplexity / eval path)
    prob = code_count / jnp.sum(code_count)
    perplexity = jnp.exp(-jnp.sum(prob * jnp.log(prob + 1e-7)))

    # straight-through estimator: x + (x_d - x).detach() == x_d in value.
    # TODO(synk): gradient routing of the straight-through estimator and the
    # training-time EMA codebook update (init_codebook / update_codebook) are
    # autodiff / training-state concerns, not part of this forward kernel.
    return x_d, commit_loss, perplexity


if __name__ == "__main__":
    nb_code, code_dim = 64, 32

    def reference(x, codebook):
        n_, d_, t_ = x.shape
        xf = jnp.transpose(x, (0, 2, 1)).reshape(-1, d_)
        dist = (jnp.sum(xf ** 2, -1, keepdims=True)
                - 2 * xf @ codebook.T
                + jnp.sum(codebook ** 2, -1)[None, :])
        idx = jnp.argmin(dist, axis=-1)
        xd = codebook[idx]
        ref_xd = jnp.transpose(xd.reshape(n_, t_, d_), (0, 2, 1))
        ref_loss = jnp.mean((xf - xd) ** 2)
        cnt = jnp.sum(jax.nn.one_hot(idx, codebook.shape[0],
                                     dtype=jnp.float32), axis=0)
        prob = cnt / jnp.sum(cnt)
        ref_ppl = jnp.exp(-jnp.sum(prob * jnp.log(prob + 1e-7)))
        return ref_xd, ref_loss, ref_ppl

    key = jax.random.PRNGKey(0)
    k_cb, k_small, k_big = jax.random.split(key, 3)
    codebook = jax.random.normal(k_cb, (nb_code, code_dim), dtype=jnp.float32)

    # tiny T  -> exercises the transposed fallback path
    x_small = jax.random.normal(k_small, (2, code_dim, 16), dtype=jnp.float32)
    # T >= 128 -> exercises the native (N, D, T) hot path (no wrapper transposes)
    x_big = jax.random.normal(k_big, (2, code_dim, 256), dtype=jnp.float32)

    for x in (x_small, x_big):
        out = quantize_ema_forward(x, codebook)
        jax.block_until_ready(out)
        x_d, commit_loss, perplexity = out
        ref_xd, ref_loss, ref_ppl = reference(x, codebook)
        assert jnp.allclose(x_d, ref_xd, atol=1e-5), "x_d mismatch"
        assert jnp.allclose(commit_loss, ref_loss, atol=1e-5), "commit_loss mismatch"
        assert jnp.allclose(perplexity, ref_ppl, atol=1e-4), "perplexity mismatch"

    print("KERNEL_OK")
</pallas_src>

<mosaic_0001>
module attributes {stable_mosaic.version = 11 : i64} {
  func.func @_vq_kernel(%arg0: i32, %arg1: i32, %arg2: memref<32x32xf32, #tpu.memory_space<vmem>>, %arg3: memref<64x32xf32, #tpu.memory_space<vmem>>, %arg4: memref<32x64xf32, #tpu.memory_space<vmem>>, %arg5: memref<64x1xf32, #tpu.memory_space<vmem>>, %arg6: memref<32x32xf32, #tpu.memory_space<vmem>>, %arg7: memref<1x64x1xf32, #tpu.memory_space<vmem>>, %arg8: memref<1x1x1xf32, #tpu.memory_space<vmem>>) attributes {dimension_semantics = [#tpu.dimension_semantics<arbitrary>, #tpu.dimension_semantics<arbitrary>], iteration_bounds = array<i64: 1, 1>, scalar_prefetch = 0 : i64, scratch_operands = 0 : i64, tpu.core_type = #tpu.core_type<tc>, window_params = [{transform_indices = @transform_0, window_bounds = array<i64: 32, 32>}, {pipeline_mode = #tpu.pipeline_mode<synchronous>, transform_indices = @transform_1, window_bounds = array<i64: 64, 32>}, {pipeline_mode = #tpu.pipeline_mode<synchronous>, transform_indices = @transform_2, window_bounds = array<i64: 32, 64>}, {pipeline_mode = #tpu.pipeline_mode<synchronous>, transform_indices = @transform_3, window_bounds = array<i64: 64, 1>}, {transform_indices = @transform_4, window_bounds = array<i64: 32, 32>}, {pipeline_mode = #tpu.pipeline_mode<synchronous>, transform_indices = @transform_5, window_bounds = array<i64: 1, 64, 1>}, {pipeline_mode = #tpu.pipeline_mode<synchronous>, transform_indices = @transform_6, window_bounds = array<i64: 1, 1, 1>}]} {
    %c0_i32 = arith.constant 0 : i32
    %0 = arith.cmpi eq, %arg1, %c0_i32 : i32
    %1 = arith.extui %0 : i1 to i32
    %c0_i32_0 = arith.constant 0 : i32
    %2 = arith.cmpi ne, %1, %c0_i32_0 : i32
    scf.if %2 {
      %cst_27 = arith.constant 0.000000e+00 : f32
      %44 = vector.broadcast %cst_27 : f32 to vector<1x64x1xf32>
      %c0_28 = arith.constant 0 : index
      %c0_29 = arith.constant 0 : index
      %c0_30 = arith.constant 0 : index
      %45 = vector.load %arg7[%c0_28, %c0_29, %c0_30] : memref<1x64x1xf32, #tpu.memory_space<vmem>>, vector<1x64x1xf32>
      tpu.vector_store %arg7[%c0_28, %c0_29, %c0_30], %44 {strides = array<i32>} : memref<1x64x1xf32, #tpu.memory_space<vmem>>, vector<1x64x1xf32>,
      %cst_31 = arith.constant 0.000000e+00 : f32
      %46 = vector.broadcast %cst_31 : f32 to vector<1x1x1xf32>
      %c0_32 = arith.constant 0 : index
      %c0_33 = arith.constant 0 : index
      %c0_34 = arith.constant 0 : index
      %47 = vector.load %arg8[%c0_32, %c0_33, %c0_34] : memref<1x1x1xf32, #tpu.memory_space<vmem>>, vector<1x1x1xf32>
      tpu.vector_store %arg8[%c0_32, %c0_33, %c0_34], %46 {strides = array<i32>} : memref<1x1x1xf32, #tpu.memory_space<vmem>>, vector<1x1x1xf32>,
    } else {
    }
    %c0 = arith.constant 0 : index
    %c0_1 = arith.constant 0 : index
    %3 = vector.load %arg2[%c0, %c0_1] : memref<32x32xf32, #tpu.memory_space<vmem>>, vector<32x32xf32>
    %c0_2 = arith.constant 0 : index
    %c0_3 = arith.constant 0 : index
    %4 = vector.load %arg3[%c0_2, %c0_3] : memref<64x32xf32, #tpu.memory_space<vmem>>, vector<64x32xf32>
    %c0_4 = arith.constant 0 : index
    %c0_5 = arith.constant 0 : index
    %5 = vector.load %arg4[%c0_4, %c0_5] : memref<32x64xf32, #tpu.memory_space<vmem>>, vector<32x64xf32>
    %c0_6 = arith.constant 0 : index
    %c0_7 = arith.constant 0 : index
    %6 = vector.load %arg5[%c0_6, %c0_7] : memref<64x1xf32, #tpu.memory_space<vmem>>, vector<64x1xf32>
    %cst = arith.constant dense<0.000000e+00> : vector<64x32xf32>
    %7 = tpu.matmul %4, %3, %cst {dimension_numbers = #tpu.dot_dimension_numbers<[1], [0], [0], [1], [0, 0, 1, 1], [], []>} : vector<64x32xf32>, vector<32x32xf32>, vector<64x32xf32> -> vector<64x32xf32>
    %8 = vector.broadcast %6 : vector<64x1xf32> to vector<64x32xf32>
    %9 = arith.addf %8, %7 : vector<64x32xf32>
    %cst_8 = arith.constant dense<0x7F800000> : vector<32xf32>
    %10 = vector.multi_reduction <minimumf>, %9, %cst_8 [0] : vector<64x32xf32> to vector<32xf32>
    %11 = vector.shape_cast %10 : vector<32xf32> to vector<1x32xf32>
    %12 = tpu.iota {dimensions = array<i32: 0>} : vector<64x1xi32>
    %13 = vector.broadcast %11 : vector<1x32xf32> to vector<64x32xf32>
    %14 = arith.cmpf ole, %9, %13 : vector<64x32xf32>
    %c64_i32 = arith.constant 64 : i32
    %15 = vector.shape_cast %12 : vector<64x1xi32> to vector<64x1xi32>
    %16 = vector.broadcast %15 : vector<64x1xi32> to vector<64x32xi32>
    %17 = vector.broadcast %c64_i32 : i32 to vector<64x32xi32>
    %18 = arith.select %14, %16, %17 : vector<64x32xi1>, vector<64x32xi32>
    %cst_9 = arith.constant dense<2147483647> : vector<32xi32>
    %19 = vector.multi_reduction <minsi>, %18, %cst_9 [0] : vector<64x32xi32> to vector<32xi32>
    %20 = vector.shape_cast %19 : vector<32xi32> to vector<1x32xi32>
    %21 = vector.broadcast %12 : vector<64x1xi32> to vector<64x32xi32>
    %22 = vector.broadcast %20 : vector<1x32xi32> to vector<64x32xi32>
    %23 = arith.cmpi eq, %21, %22 : vector<64x32xi32>
    %24 = arith.extui %23 : vector<64x32xi1> to vector<64x32xi32>
    %25 = arith.sitofp %24 : vector<64x32xi32> to vector<64x32xf32>
    %cst_10 = arith.constant dense<0.000000e+00> : vector<32x32xf32>
    %26 = tpu.matmul %5, %25, %cst_10 {dimension_numbers = #tpu.dot_dimension_numbers<[1], [0], [0], [1], [0, 0, 1, 1], [], []>} : vector<32x64xf32>, vector<64x32xf32>, vector<32x32xf32> -> vector<32x32xf32>
    %c0_11 = arith.constant 0 : index
    %c0_12 = arith.constant 0 : index
    %27 = vector.load %arg6[%c0_11, %c0_12] : memref<32x32xf32, #tpu.memory_space<vmem>>, vector<32x32xf32>
    tpu.vector_store %arg6[%c0_11, %c0_12], %26 {strides = array<i32>} : memref<32x32xf32, #tpu.memory_space<vmem>>, vector<32x32xf32>,
    %28 = arith.subf %3, %26 : vector<32x32xf32>
    %c0_13 = arith.constant 0 : index
    %c0_14 = arith.constant 0 : index
    %c0_15 = arith.constant 0 : index
    %29 = vector.load %arg7[%c0_13, %c0_14, %c0_15] : memref<1x64x1xf32, #tpu.memory_space<vmem>>, vector<1x64x1xf32>
    %cst_16 = arith.constant dense<0.000000e+00> : vector<64xf32>
    %30 = vector.multi_reduction <add>, %25, %cst_16 [1] : vector<64x32xf32> to vector<64xf32>
    %31 = vector.shape_cast %30 : vector<64xf32> to vector<64x1xf32>
    %32 = vector.shape_cast %31 : vector<64x1xf32> to vector<1x64x1xf32>
    %33 = arith.addf %29, %32 : vector<1x64x1xf32>
    %c0_17 = arith.constant 0 : index
    %c0_18 = arith.constant 0 : index
    %c0_19 = arith.constant 0 : index
    %34 = vector.load %arg7[%c0_17, %c0_18, %c0_19] : memref<1x64x1xf32, #tpu.memory_space<vmem>>, vector<1x64x1xf32>
    tpu.vector_store %arg7[%c0_17, %c0_18, %c0_19], %33 {strides = array<i32>} : memref<1x64x1xf32, #tpu.memory_space<vmem>>, vector<1x64x1xf32>,
    %c0_20 = arith.constant 0 : index
    %c0_21 = arith.constant 0 : index
    %c0_22 = arith.constant 0 : index
    %35 = vector.load %arg8[%c0_20, %c0_21, %c0_22] : memref<1x1x1xf32, #tpu.memory_space<vmem>>, vector<1x1x1xf32>
    %36 = arith.mulf %28, %28 : vector<32x32xf32>
    %37 = vector.shape_cast %36 : vector<32x32xf32> to vector<1x32x32xf32>
    %cst_23 = arith.constant dense<0.000000e+00> : vector<1xf32>
    %38 = vector.multi_reduction <add>, %37, %cst_23 [1, 2] : vector<1x32x32xf32> to vector<1xf32>
    %39 = vector.shape_cast %38 : vector<1xf32> to vector<1x1x1xf32>
    %40 = vector.extract %39[0, 0, 0] : f32 from vector<1x1x1xf32>
    %41 = vector.broadcast %40 : f32 to vector<1x1x1xf32>
    %42 = arith.addf %35, %41 : vector<1x1x1xf32>
    %c0_24 = arith.constant 0 : index
    %c0_25 = arith.constant 0 : index
    %c0_26 = arith.constant 0 : index
    %43 = vector.load %arg8[%c0_24, %c0_25, %c0_26] : memref<1x1x1xf32, #tpu.memory_space<vmem>>, vector<1x1x1xf32>
    tpu.vector_store %arg8[%c0_24, %c0_25, %c0_26], %42 {strides = array<i32>} : memref<1x1x1xf32, #tpu.memory_space<vmem>>, vector<1x1x1xf32>,
    return
  }
  func.func @transform_0(%arg0: i32, %arg1: i32) -> (i32, i32) {
    %c0_i32 = arith.constant 0 : i32
    %c0_i32_0 = arith.constant 0 : i32
    return %c0_i32, %arg1 : i32, i32
  }
  func.func @transform_1(%arg0: i32, %arg1: i32) -> (i32, i32) {
    %c0_i32 = arith.constant 0 : i32
    %c0_i32_0 = arith.constant 0 : i32
    %c0_i32_1 = arith.constant 0 : i32
    return %c0_i32, %c0_i32_0 : i32, i32
  }
  func.func @transform_2(%arg0: i32, %arg1: i32) -> (i32, i32) {
    %c0_i32 = arith.constant 0 : i32
    %c0_i32_0 = arith.constant 0 : i32
    %c0_i32_1 = arith.constant 0 : i32
    return %c0_i32, %c0_i32_0 : i32, i32
  }
  func.func @transform_3(%arg0: i32, %arg1: i32) -> (i32, i32) {
    %c0_i32 = arith.constant 0 : i32
    %c0_i32_0 = arith.constant 0 : i32
    %c0_i32_1 = arith.constant 0 : i32
    return %c0_i32, %c0_i32_0 : i32, i32
  }
  func.func @transform_4(%arg0: i32, %arg1: i32) -> (i32, i32) {
    %c0_i32 = arith.constant 0 : i32
    %c0_i32_0 = arith.constant 0 : i32
    return %c0_i32, %arg1 : i32, i32
  }
  func.func @transform_5(%arg0: i32, %arg1: i32) -> (i32, i32, i32) {
    %c0_i32 = arith.constant 0 : i32
    %c0_i32_0 = arith.constant 0 : i32
    %c0_i32_1 = arith.constant 0 : i32
    %c0_i32_2 = arith.constant 0 : i32
    return %c0_i32, %c0_i32_0, %c0_i32_1 : i32, i32, i32
  }
  func.func @transform_6(%arg0: i32, %arg1: i32) -> (i32, i32, i32) {
    %c0_i32 = arith.constant 0 : i32
    %c0_i32_0 = arith.constant 0 : i32
    %c0_i32_1 = arith.constant 0 : i32
    %c0_i32_2 = arith.constant 0 : i32
    return %c0_i32, %c0_i32_0, %c0_i32_1 : i32, i32, i32
  }
}

</mosaic_0001>

<llo_original>
// kernel: quantize_ema_forward.1
$region0: #{quantize_ema_forward.1}
  #allocation0 [shape = 'u32[]', space=smem, size = 0x4, offset = 0x4, fixed_abs, tag = 'smem constant byte address 0x4 - core index']
  #allocation1 [shape = 'u32[144,128]{1,0:T(1,128)}', space=vmem, size = 0x12000, scoped, tag = 'internal scratch']
  %s0 = inlined_call_operand.vmem [shape: f32[32,32], index: 0, kind: input, shape index: {}]
  %s1 = inlined_call_operand.vmem [shape: f32[64,32], index: 1, kind: input, shape index: {}]
  %s2 = inlined_call_operand.vmem [shape: f32[32,64], index: 2, kind: input, shape index: {}]
  %s3 = inlined_call_operand.vmem [shape: f32[64,1], index: 3, kind: input, shape index: {}]
  %s4 = inlined_call_operand.vmem [shape: f32[32,32], index: 4, kind: output, shape index: {0}]
  %s5 = inlined_call_operand.vmem [shape: f32[1,64,1], index: 5, kind: output, shape index: {1}]
  %s6 = inlined_call_operand.hbm [shape: f32[1,1,1], index: 6, kind: output, shape index: {2}]
  %7 = xla_tuple %s4, %s5, %s6
  %s8 = sld [smem:[#allocation0]]
  $region46: #{quantize_ema_forward.1} parent=0
    _
  %s10 = ssub.s32 1, %s8
  %s11 = scalar_select 0, %s10, %s8
  $region1: #{quantize_ema_forward.1} parent=0
    #allocation2 [shape = 'u8[512]{0}', space=vmem, size = 0x400, scoped, tag = 'output window, operand 2, single buffered']
    #allocation3 [shape = 's32[1]{0}', space=sflag, size = 0x4, scoped, tag = 'scoped memory for quantize_ema_forward.1']
    %12 = vsyncpa [#allocation3], 0
    // Predicated region
    $region2: #{quantize_ema_forward.1} parent=1 // pred_check
      _
    $region3: #{quantize_ema_forward.1} parent=1 // pred_check_branch
      %14 = sbr.rel (0) target = $region5
    $region4: #{quantize_ema_forward.1} parent=1 // pred_region
      _
    $region5: #{quantize_ema_forward.1} parent=1 // pred_fallthru
      _
    // Predicated region
    $region6: #{quantize_ema_forward.1} parent=1 // pred_check
      _
    $region7: #{quantize_ema_forward.1} parent=1 // pred_check_branch
      %16 = sbr.rel (0) target = $region9
    $region8: #{quantize_ema_forward.1} parent=1 // pred_region
      _
    $region9: #{quantize_ema_forward.1} parent=1 // pred_fallthru
      _
    // Predicated region
    $region10: #{quantize_ema_forward.1} parent=1 // pred_check
      _
    $region11: #{quantize_ema_forward.1} parent=1 // pred_check_branch
      %18 = sbr.rel (0) target = $region13
    $region12: #{quantize_ema_forward.1} parent=1 // pred_region
      _
    $region13: #{quantize_ema_forward.1} parent=1 // pred_fallthru
      _
    // Predicated region
    $region14: #{quantize_ema_forward.1} parent=1 // pred_check
      _
    $region15: #{quantize_ema_forward.1} parent=1 // pred_check_branch
      %20 = sbr.rel (0) target = $region17
    $region16: #{quantize_ema_forward.1} parent=1 // pred_region
      _
    $region17: #{quantize_ema_forward.1} parent=1 // pred_fallthru
      _
    %p21 = scmp.eq.s32.totalorder 0, 0
    // Predicated region
    $region18: #{quantize_ema_forward.1} parent=1 // pred_check
      %p22 = pneg %p21
    $region19: #{quantize_ema_forward.1} parent=1 // pred_check_branch
      %24 = sbr.rel (%p22) target = $region21
    $region20: #{quantize_ema_forward.1} parent=1 // pred_region
      %vm25 = vcmask 7168
      %26 = vst.msk [vmem:[%s5] sm:$0xff] %vm25, 0.0
      %27 = vst.msk [vmem:[%s5 + $0x8] sm:$0xff] %vm25, 0.0
      %28 = vst.msk [vmem:[%s5 + $0x10] sm:$0xff] %vm25, 0.0
      %29 = vst.msk [vmem:[%s5 + $0x18] sm:$0xff] %vm25, 0.0
      %30 = vst.msk [vmem:[%s5 + $0x20] sm:$0xff] %vm25, 0.0
      %31 = vst.msk [vmem:[%s5 + $0x28] sm:$0xff] %vm25, 0.0
      %32 = vst.msk [vmem:[%s5 + $0x30] sm:$0xff] %vm25, 0.0
      %33 = vst.msk [vmem:[%s5 + $0x38] sm:$0xff] %vm25, 0.0
      %vm34 = vcmask 0
      %35 = vst.msk [vmem:[#allocation2] sm:$0x1] %vm34, 0.0
    $region21: #{quantize_ema_forward.1} parent=1 // pred_fallthru
      _
    %v36 = vld [vmem:[%s0] sm:$0xff]
    %v37 = vld [vmem:[%s0 + $0x8] sm:$0xff]
    %v38 = vld [vmem:[%s0 + $0x10] sm:$0xff]
    %v39 = vld [vmem:[%s0 + $0x18] sm:$0xff]
    %v40 = vld [vmem:[%s1] sm:$0xff]
    %v41 = vld [vmem:[%s1 + $0x8] sm:$0xff]
    %v42 = vld [vmem:[%s1 + $0x10] sm:$0xff]
    %v43 = vld [vmem:[%s1 + $0x18] sm:$0xff]
    %v44 = vld [vmem:[%s1 + $0x20] sm:$0xff]
    %v45 = vld [vmem:[%s1 + $0x28] sm:$0xff]
    %v46 = vld [vmem:[%s1 + $0x30] sm:$0xff]
    %v47 = vld [vmem:[%s1 + $0x38] sm:$0xff]
    %v48 = vld [vmem:[%s2] sm:$0xff]
    %v49 = vld [vmem:[%s2 + $0x8] sm:$0xff]
    %v50 = vld [vmem:[%s2 + $0x10] sm:$0xff]
    %v51 = vld [vmem:[%s2 + $0x18] sm:$0xff]
    %v52 = vld [vmem:[%s3] sm:$0xff]
    %v53 = vld [vmem:[%s3 + $0x8] sm:$0xff]
    %v54 = vld [vmem:[%s3 + $0x10] sm:$0xff]
    %v55 = vld [vmem:[%s3 + $0x18] sm:$0xff]
    %v56 = vld [vmem:[%s3 + $0x20] sm:$0xff]
    %v57 = vld [vmem:[%s3 + $0x28] sm:$0xff]
    %v58 = vld [vmem:[%s3 + $0x30] sm:$0xff]
    %v59 = vld [vmem:[%s3 + $0x38] sm:$0xff]
    %vm60 = vcmask 261120
    %v62 = vsel %vm60, %v40, 0
    %v65 = vsel %vm60, %v41, 0
    %v68 = vsel %vm60, %v42, 0
    %v71 = vsel %vm60, %v43, 0
    %v74 = vsel %vm60, %v44, 0
    %v77 = vsel %vm60, %v45, 0
    %v80 = vsel %vm60, %v46, 0
    %v83 = vsel %vm60, %v47, 0
    %85 = vmatprep.subr.mxu0 0.0
    %86 = vmatpush1.msra.mxu0 0.0
    %87 = vmatprep.subr.mxu0 0.0
    %88 = vmatpush1.msra.mxu0 0.0
    %89 = vmatprep.subr.mxu0 0.0
    %90 = vmatpush1.msra.mxu0 0.0
    %91 = vmatprep.subr.mxu0 0.0
    %92 = vmatpush1.msra.mxu0 0.0
    %93 = vmatprep.subr.mxu0 0.0
    %94 = vmatpush1.msra.mxu0 0.0
    %95 = vmatprep.subr.mxu0 0.0
    %96 = vmatpush1.msra.mxu0 0.0
    %97 = vmatprep.subr.mxu0 0.0
    %98 = vmatpush1.msra.mxu0 0.0
    %99 = vmatprep.subr.mxu0 0.0
    %100 = vmatpush1.msra.mxu0 0.0
    %101 = vmatprep.subr.mxu0 0.0
    %102 = vmatpush1.msra.mxu0 0.0
    %103 = vmatprep.subr.mxu0 0.0
    %104 = vmatpush1.msra.mxu0 0.0
    %105 = vmatprep.subr.mxu0 0.0
    %106 = vmatpush1.msra.mxu0 0.0
    %107 = vmatprep.subr.mxu0 0.0
    %108 = vmatpush1.msra.mxu0 0.0
    %109 = vmatprep.subr.mxu0 0.0
    %110 = vmatpush1.msra.mxu0 %v39
    %111 = vmatprep.subr.mxu0 0.0
    %112 = vmatpush1.msra.mxu0 %v38
    %113 = vmatprep.subr.mxu0 0.0
    %114 = vmatpush1.msra.mxu0 %v37
    %115 = vmatprep.subr.mxu0 0.0
    %116 = vmatpush1.msra.mxu0 %v36
    %117 = vmatprep.subr.mxu0 0.0
    %118 = vmatpush2.msra.mxu0 0.0
    %119 = vmatprep.subr.mxu0 0.0
    %120 = vmatpush2.msra.mxu0 0.0
    %121 = vmatprep.subr.mxu0 0.0
    %122 = vmatpush2.msra.mxu0 0.0
    %123 = vmatprep.subr.mxu0 0.0
    %124 = vmatpush2.msra.mxu0 0.0
    %125 = vmatprep.subr.mxu0 0.0
    %126 = vmatpush2.msra.mxu0 0.0
    %127 = vmatprep.subr.mxu0 0.0
    %128 = vmatpush2.msra.mxu0 0.0
    %129 = vmatprep.subr.mxu0 0.0
    %130 = vmatpush2.msra.mxu0 0.0
    %131 = vmatprep.subr.mxu0 0.0
    %132 = vmatpush2.msra.mxu0 0.0
    %133 = vmatprep.subr.mxu0 0.0
    %134 = vmatpush2.msra.mxu0 0.0
    %135 = vmatprep.subr.mxu0 0.0
    %136 = vmatpush2.msra.mxu0 0.0
    %137 = vmatprep.subr.mxu0 0.0
    %138 = vmatpush2.msra.mxu0 0.0
    %139 = vmatprep.subr.mxu0 0.0
    %140 = vmatpush2.msra.mxu0 0.0
    %141 = vmatprep.subr.mxu0 0.0
    %142 = vmatpush2.msra.mxu0 0.0
    %143 = vmatprep.subr.mxu0 0.0
    %144 = vmatpush2.msra.mxu0 0.0
    %145 = vmatprep.subr.mxu0 0.0
    %146 = vmatpush2.msra.mxu0 0.0
    %147 = vmatprep.subr.mxu0 0.0
    %148 = vmatpush2.msra.mxu0 0.0
    %149 = vmatprep.mubr.f32.mxu0 0.0
    %150 = vmatmul.mubr.f32.gmra.mxu0 %v62
    %v151 = vpop.f32.mrf.mxu0
    %v152 = vadd.f32 0.0, %v151
    %v153 = vpop.f32.mrf.mxu0
    %154 = vmatprep.mubr.f32.mxu0 0.0
    %155 = vmatmul.mubr.f32.gmra.mxu0 %v65
    %v156 = vpop.f32.mrf.mxu0
    %v157 = vadd.f32 0.0, %v156
    %v158 = vpop.f32.mrf.mxu0
    %159 = vmatprep.mubr.f32.mxu0 0.0
    %160 = vmatmul.mubr.f32.gmra.mxu0 %v68
    %v161 = vpop.f32.mrf.mxu0
    %v162 = vadd.f32 0.0, %v161
    %v163 = vpop.f32.mrf.mxu0
    %164 = vmatprep.mubr.f32.mxu0 0.0
    %165 = vmatmul.mubr.f32.gmra.mxu0 %v71
    %v166 = vpop.f32.mrf.mxu0
    %v167 = vadd.f32 0.0, %v166
    %v168 = vpop.f32.mrf.mxu0
    %169 = vmatprep.mubr.f32.mxu0 0.0
    %170 = vmatmul.mubr.f32.gmra.mxu0 %v74
    %v171 = vpop.f32.mrf.mxu0
    %v172 = vadd.f32 0.0, %v171
    %v173 = vpop.f32.mrf.mxu0
    %174 = vmatprep.mubr.f32.mxu0 0.0
    %175 = vmatmul.mubr.f32.gmra.mxu0 %v77
    %v176 = vpop.f32.mrf.mxu0
    %v177 = vadd.f32 0.0, %v176
    %v178 = vpop.f32.mrf.mxu0
    %179 = vmatprep.mubr.f32.mxu0 0.0
    %180 = vmatmul.mubr.f32.gmra.mxu0 %v80
    %v181 = vpop.f32.mrf.mxu0
    %v182 = vadd.f32 0.0, %v181
    %v183 = vpop.f32.mrf.mxu0
    %184 = vmatprep.mubr.f32.mxu0 0.0
    %185 = vmatmul.mubr.f32.gmra.mxu0 %v83
    %v186 = vpop.f32.mrf.mxu0
    %v187 = vadd.f32 0.0, %v186
    %v188 = vpop.f32.mrf.mxu0
    %189 = vdwg.mxu0
    %191 = vset.pattern.permute.xlu0 0
    %192 = vperm.xlu0 %191, %v52
    %v193 = vpop.permute.xlu0 %192
    %196 = vset.pattern.permute.xlu0 0
    %197 = vperm.xlu0 %196, %v53
    %v198 = vpop.permute.xlu0 %197
    %201 = vset.pattern.permute.xlu0 0
    %202 = vperm.xlu0 %201, %v54
    %v203 = vpop.permute.xlu0 %202
    %206 = vset.pattern.permute.xlu0 0
    %207 = vperm.xlu0 %206, %v55
    %v208 = vpop.permute.xlu0 %207
    %211 = vset.pattern.permute.xlu0 0
    %212 = vperm.xlu0 %211, %v56
    %v213 = vpop.permute.xlu0 %212
    %216 = vset.pattern.permute.xlu0 0
    %217 = vperm.xlu0 %216, %v57
    %v218 = vpop.permute.xlu0 %217
    %221 = vset.pattern.permute.xlu0 0
    %222 = vperm.xlu0 %221, %v58
    %v223 = vpop.permute.xlu0 %222
    %226 = vset.pattern.permute.xlu0 0
    %227 = vperm.xlu0 %226, %v59
    %v228 = vpop.permute.xlu0 %227
    %v230 = vadd.f32 %v193, %v152
    %v231 = vadd.f32 %v198, %v157
    %v232 = vadd.f32 %v203, %v162
    %v233 = vadd.f32 %v208, %v167
    %v234 = vadd.f32 %v213, %v172
    %v235 = vadd.f32 %v218, %v177
    %v236 = vadd.f32 %v223, %v182
    %v237 = vadd.f32 %v228, %v187
    %v238 = vsel %vm60, %v230, inf
    %v239 = vsel %vm60, %v231, inf
    %v240 = vsel %vm60, %v232, inf
    %v241 = vsel %vm60, %v233, inf
    %v242 = vsel %vm60, %v234, inf
    %v243 = vmin.f32 %v238, %v242
    %v244 = vsel %vm60, %v235, inf
    %v245 = vmin.f32 %v239, %v244
    %v246 = vsel %vm60, %v236, inf
    %v247 = vmin.f32 %v240, %v246
    %v248 = vsel %vm60, %v237, inf
    %v249 = vmin.f32 %v241, %v248
    %v250 = vmin.f32 %v243, %v245
    %v251 = vmin.f32 %v247, %v249
    %v252 = vmin.f32 %v250, %v251
    %v253 = vrot.slane %v252, 4
    %v254 = vmin.f32 %v252, %v253
    %v255 = vrot.slane %v254, 2
    %v256 = vmin.f32 %v254, %v255
    %v257 = vrot.slane %v256, 1
    %v258 = vmin.f32 %v256, %v257
    %v259 = vlaneseq
    %v260 = vshrl.u32 %v259, 7
    %v261 = vadd.s32 %v260, 8
    %v262 = vadd.s32 %v260, 16
    %v263 = vadd.s32 %v260, 24
    %v264 = vadd.s32 %v260, 32
    %v265 = vadd.s32 %v260, 40
    %v266 = vadd.s32 %v260, 48
    %v267 = vadd.s32 %v260, 56
    %vm268 = vcmp.le.f32.partialorder %v230, %v258
    %vm269 = vcmp.le.f32.partialorder %v231, %v258
    %vm270 = vcmp.le.f32.partialorder %v232, %v258
    %vm271 = vcmp.le.f32.partialorder %v233, %v258
    %vm272 = vcmp.le.f32.partialorder %v234, %v258
    %vm273 = vcmp.le.f32.partialorder %v235, %v258
    %vm274 = vcmp.le.f32.partialorder %v236, %v258
    %vm275 = vcmp.le.f32.partialorder %v237, %v258
    %v276 = vsel %vm268, %v260, 64
    %v277 = vsel %vm269, %v261, 64
    %v278 = vsel %vm270, %v262, 64
    %v279 = vsel %vm271, %v263, 64
    %v280 = vsel %vm272, %v264, 64
    %v281 = vsel %vm273, %v265, 64
    %v282 = vsel %vm274, %v266, 64
    %v283 = vsel %vm275, %v267, 64
    %v284 = vsel %vm60, %v276, 2147483647
    %v285 = vsel %vm60, %v277, 2147483647
    %v286 = vsel %vm60, %v278, 2147483647
    %v287 = vsel %vm60, %v279, 2147483647
    %v288 = vsel %vm60, %v280, 2147483647
    %vm289 = vcmp.lt.s32.totalorder %v284, %v288
    %v290 = vsel %vm289, %v284, %v288
    %v291 = vsel %vm60, %v281, 2147483647
    %vm292 = vcmp.lt.s32.totalorder %v285, %v291
    %v293 = vsel %vm292, %v285, %v291
    %v294 = vsel %vm60, %v282, 2147483647
    %vm295 = vcmp.lt.s32.totalorder %v286, %v294
    %v296 = vsel %vm295, %v286, %v294
    %v297 = vsel %vm60, %v283, 2147483647
    %vm298 = vcmp.lt.s32.totalorder %v287, %v297
    %v299 = vsel %vm298, %v287, %v297
    %vm300 = vcmp.lt.s32.totalorder %v290, %v293
    %v301 = vsel %vm300, %v290, %v293
    %vm302 = vcmp.lt.s32.totalorder %v296, %v299
    %v303 = vsel %vm302, %v296, %v299
    %vm304 = vcmp.lt.s32.totalorder %v301, %v303
    %v305 = vsel %vm304, %v301, %v303
    %v306 = vrot.slane %v305, 4
    %vm307 = vcmp.lt.s32.totalorder %v305, %v306
    %v308 = vsel %vm307, %v305, %v306
    %v309 = vrot.slane %v308, 2
    %vm310 = vcmp.lt.s32.totalorder %v308, %v309
    %v311 = vsel %vm310, %v308, %v309
    %v312 = vrot.slane %v311, 1
    %vm313 = vcmp.lt.s32.totalorder %v311, %v312
    %v314 = vsel %vm313, %v311, %v312
    %vm315 = vcmp.eq.s32.totalorder %v260, %v314
    %vm316 = vcmp.eq.s32.totalorder %v261, %v314
    %vm317 = vcmp.eq.s32.totalorder %v262, %v314
    %vm318 = vcmp.eq.s32.totalorder %v263, %v314
    %vm319 = vcmp.eq.s32.totalorder %v264, %v314
    %vm320 = vcmp.eq.s32.totalorder %v265, %v314
    %vm321 = vcmp.eq.s32.totalorder %v266, %v314
    %vm322 = vcmp.eq.s32.totalorder %v267, %v314
    %v323 = vsel %vm315, 1, 0
    %v324 = vsel %vm316, 1, 0
    %v325 = vsel %vm317, 1, 0
    %v326 = vsel %vm318, 1, 0
    %v327 = vsel %vm319, 1, 0
    %v328 = vsel %vm320, 1, 0
    %v329 = vsel %vm321, 1, 0
    %v330 = vsel %vm322, 1, 0
    %v331 = vcvt.s32.f32 %v323
    %v332 = vcvt.s32.f32 %v324
    %v333 = vcvt.s32.f32 %v325
    %v334 = vcvt.s32.f32 %v326
    %v335 = vcvt.s32.f32 %v327
    %v336 = vcvt.s32.f32 %v328
    %v337 = vcvt.s32.f32 %v329
    %v338 = vcvt.s32.f32 %v330
    %vm339 = vcmask 523264
    %v341 = vsel %vm339, %v48, 0
    %v344 = vsel %vm339, %v49, 0
    %v347 = vsel %vm339, %v50, 0
    %v350 = vsel %vm339, %v51, 0
    %352 = vmatprep.subr.mxu0 0.0
    %353 = vmatpush1.msra.mxu0 0.0
    %354 = vmatprep.subr.mxu0 0.0
    %355 = vmatpush1.msra.mxu0 0.0
    %356 = vmatprep.subr.mxu0 0.0
    %357 = vmatpush1.msra.mxu0 0.0
    %358 = vmatprep.subr.mxu0 0.0
    %359 = vmatpush1.msra.mxu0 0.0
    %360 = vmatprep.subr.mxu0 0.0
    %361 = vmatpush1.msra.mxu0 0.0
    %362 = vmatprep.subr.mxu0 0.0
    %363 = vmatpush1.msra.mxu0 0.0
    %364 = vmatprep.subr.mxu0 0.0
    %365 = vmatpush1.msra.mxu0 0.0
    %366 = vmatprep.subr.mxu0 0.0
    %367 = vmatpush1.msra.mxu0 0.0
    %368 = vmatprep.subr.mxu0 0.0
    %369 = vmatpush1.msra.mxu0 %v338
    %370 = vmatprep.subr.mxu0 0.0
    %371 = vmatpush1.msra.mxu0 %v337
    %372 = vmatprep.subr.mxu0 0.0
    %373 = vmatpush1.msra.mxu0 %v336
    %374 = vmatprep.subr.mxu0 0.0
    %375 = vmatpush1.msra.mxu0 %v335
    %376 = vmatprep.subr.mxu0 0.0
    %377 = vmatpush1.msra.mxu0 %v334
    %378 = vmatprep.subr.mxu0 0.0
    %379 = vmatpush1.msra.mxu0 %v333
    %380 = vmatprep.subr.mxu0 0.0
    %381 = vmatpush1.msra.mxu0 %v332
    %382 = vmatprep.subr.mxu0 0.0
    %383 = vmatpush1.msra.mxu0 %v331
    %384 = vmatprep.subr.mxu0 0.0
    %385 = vmatpush2.msra.mxu0 0.0
    %386 = vmatprep.subr.mxu0 0.0
    %387 = vmatpush2.msra.mxu0 0.0
    %388 = vmatprep.subr.mxu0 0.0
    %389 = vmatpush2.msra.mxu0 0.0
    %390 = vmatprep.subr.mxu0 0.0
    %391 = vmatpush2.msra.mxu0 0.0
    %392 = vmatprep.subr.mxu0 0.0
    %393 = vmatpush2.msra.mxu0 0.0
    %394 = vmatprep.subr.mxu0 0.0
    %395 = vmatpush2.msra.mxu0 0.0
    %396 = vmatprep.subr.mxu0 0.0
    %397 = vmatpush2.msra.mxu0 0.0
    %398 = vmatprep.subr.mxu0 0.0
    %399 = vmatpush2.msra.mxu0 0.0
    %400 = vmatprep.subr.mxu0 0.0
    %401 = vmatpush2.msra.mxu0 0.0
    %402 = vmatprep.subr.mxu0 0.0
    %403 = vmatpush2.msra.mxu0 0.0
    %404 = vmatprep.subr.mxu0 0.0
    %405 = vmatpush2.msra.mxu0 0.0
    %406 = vmatprep.subr.mxu0 0.0
    %407 = vmatpush2.msra.mxu0 0.0
    %408 = vmatprep.subr.mxu0 0.0
    %409 = vmatpush2.msra.mxu0 0.0
    %410 = vmatprep.subr.mxu0 0.0
    %411 = vmatpush2.msra.mxu0 0.0
    %412 = vmatprep.subr.mxu0 0.0
    %413 = vmatpush2.msra.mxu0 0.0
    %414 = vmatprep.subr.mxu0 0.0
    %415 = vmatpush2.msra.mxu0 0.0
    %416 = vmatprep.mubr.f32.mxu0 0.0
    %417 = vmatmul.mubr.f32.gmra.mxu0 %v341
    %v418 = vpop.f32.mrf.mxu0
    %v419 = vadd.f32 0.0, %v418
    %v420 = vpop.f32.mrf.mxu0
    %421 = vmatprep.mubr.f32.mxu0 0.0
    %422 = vmatmul.mubr.f32.gmra.mxu0 %v344
    %v423 = vpop.f32.mrf.mxu0
    %v424 = vadd.f32 0.0, %v423
    %v425 = vpop.f32.mrf.mxu0
    %426 = vmatprep.mubr.f32.mxu0 0.0
    %427 = vmatmul.mubr.f32.gmra.mxu0 %v347
    %v428 = vpop.f32.mrf.mxu0
    %v429 = vadd.f32 0.0, %v428
    %v430 = vpop.f32.mrf.mxu0
    %431 = vmatprep.mubr.f32.mxu0 0.0
    %432 = vmatmul.mubr.f32.gmra.mxu0 %v350
    %v433 = vpop.f32.mrf.mxu0
    %v434 = vadd.f32 0.0, %v433
    %v435 = vpop.f32.mrf.mxu0
    %436 = vdwg.mxu0
    %437 = vst.msk [vmem:[%s4] sm:$0xff] %vm60, %v419
    %438 = vst.msk [vmem:[%s4 + $0x8] sm:$0xff] %vm60, %v424
    %439 = vst.msk [vmem:[%s4 + $0x10] sm:$0xff] %vm60, %v429
    %440 = vst.msk [vmem:[%s4 + $0x18] sm:$0xff] %vm60, %v434
    %v441 = vsub.f32 %v36, %v419
    %v442 = vsub.f32 %v37, %v424
    %v443 = vsub.f32 %v38, %v429
    %v444 = vsub.f32 %v39, %v434
    %v445 = vld [vmem:[%s5] sm:$0xff]
    %v446 = vld [vmem:[%s5 + $0x8] sm:$0xff]
    %v447 = vld [vmem:[%s5 + $0x10] sm:$0xff]
    %v448 = vld [vmem:[%s5 + $0x18] sm:$0xff]
    %v449 = vld [vmem:[%s5 + $0x20] sm:$0xff]
    %v450 = vld [vmem:[%s5 + $0x28] sm:$0xff]
    %v451 = vld [vmem:[%s5 + $0x30] sm:$0xff]
    %v452 = vld [vmem:[%s5 + $0x38] sm:$0xff]
    %v453 = vsel %vm60, %v331, 0.0
    %454 = vadd.xlane.f32.xlu0 %v453
    %v455 = vpop.xlane.xlu0 %454
    %v456 = vsel %vm60, %v332, 0.0
    %457 = vadd.xlane.f32.xlu0 %v456
    %v458 = vpop.xlane.xlu0 %457
    %v459 = vsel %vm60, %v333, 0.0
    %460 = vadd.xlane.f32.xlu0 %v459
    %v461 = vpop.xlane.xlu0 %460
    %v462 = vsel %vm60, %v334, 0.0
    %463 = vadd.xlane.f32.xlu0 %v462
    %v464 = vpop.xlane.xlu0 %463
    %v465 = vsel %vm60, %v335, 0.0
    %466 = vadd.xlane.f32.xlu0 %v465
    %v467 = vpop.xlane.xlu0 %466
    %v468 = vsel %vm60, %v336, 0.0
    %469 = vadd.xlane.f32.xlu0 %v468
    %v470 = vpop.xlane.xlu0 %469
    %v471 = vsel %vm60, %v337, 0.0
    %472 = vadd.xlane.f32.xlu0 %v471
    %v473 = vpop.xlane.xlu0 %472
    %v474 = vsel %vm60, %v338, 0.0
    %475 = vadd.xlane.f32.xlu0 %v474
    %v476 = vpop.xlane.xlu0 %475
    %v477 = vadd.f32 %v445, %v455
    %v478 = vadd.f32 %v446, %v458
    %v479 = vadd.f32 %v447, %v461
    %v480 = vadd.f32 %v448, %v464
    %v481 = vadd.f32 %v449, %v467
    %v482 = vadd.f32 %v450, %v470
    %v483 = vadd.f32 %v451, %v473
    %v484 = vadd.f32 %v452, %v476
    %vm485 = vcmask 7168
    %486 = vst.msk [vmem:[%s5] sm:$0xff] %vm485, %v477
    %487 = vst.msk [vmem:[%s5 + $0x8] sm:$0xff] %vm485, %v478
    %488 = vst.msk [vmem:[%s5 + $0x10] sm:$0xff] %vm485, %v479
    %489 = vst.msk [vmem:[%s5 + $0x18] sm:$0xff] %vm485, %v480
    %490 = vst.msk [vmem:[%s5 + $0x20] sm:$0xff] %vm485, %v481
    %491 = vst.msk [vmem:[%s5 + $0x28] sm:$0xff] %vm485, %v482
    %492 = vst.msk [vmem:[%s5 + $0x30] sm:$0xff] %vm485, %v483
    %493 = vst.msk [vmem:[%s5 + $0x38] sm:$0xff] %vm485, %v484
    %v494 = vld [vmem:[#allocation2] sm:$0x1]
    %v495 = vmul.f32 %v441, %v441
    %v496 = vmul.f32 %v442, %v442
    %v497 = vmul.f32 %v443, %v443
    %v498 = vmul.f32 %v444, %v444
    %v499 = vsel %vm60, %v495, 0.0
    %v500 = vsel %vm60, %v496, 0.0
    %v501 = vadd.f32 %v499, %v500
    %v502 = vsel %vm60, %v497, 0.0
    %v503 = vadd.f32 %v501, %v502
    %v504 = vsel %vm60, %v498, 0.0
    %v505 = vadd.f32 %v503, %v504
    %506 = vadd.xlane.f32.xlu0 %v505
    %v507 = vpop.xlane.xlu0 %506
    %v508 = vrot.slane %v507, 4
    %v509 = vadd.f32 %v507, %v508
    %v510 = vrot.slane %v509, 2
    %v511 = vadd.f32 %v509, %v510
    %v512 = vrot.slane %v511, 1
    %v513 = vadd.f32 %v511, %v512
    %s514 = vtos %v513
    %v515 = vstv %s514
    %v516 = vadd.f32 %v494, %v515
    %vm517 = vcmask 0
    %518 = vst.msk [vmem:[#allocation2] sm:$0x1] %vm517, %v516
    // Predicated region
    $region22: #{quantize_ema_forward.1} parent=1 // pred_check
      _
    $region23: #{quantize_ema_forward.1} parent=1 // pred_check_branch
      %520 = sbr.rel (0) target = $region25
    $region24: #{quantize_ema_forward.1} parent=1 // pred_region
      _
    $region25: #{quantize_ema_forward.1} parent=1 // pred_fallthru
      _
    // Predicated region
    $region26: #{quantize_ema_forward.1} parent=1 // pred_check
      _
    $region27: #{quantize_ema_forward.1} parent=1 // pred_check_branch
      %522 = sbr.rel (0) target = $region29
    $region28: #{quantize_ema_forward.1} parent=1 // pred_region
      _
    $region29: #{quantize_ema_forward.1} parent=1 // pred_fallthru
      _
    // Predicated region
    $region30: #{quantize_ema_forward.1} parent=1 // pred_check
      _
    $region31: #{quantize_ema_forward.1} parent=1 // pred_check_branch
      %524 = sbr.rel (0) target = $region33
    $region32: #{quantize_ema_forward.1} parent=1 // pred_region
      %s526 = ssub.s32 16, 16
      %527 = vsyncadd [#allocation3], %s526
      %s529 = sshll.u32 [#allocation2], 4
      %s530 = int_to_ptr.vmem [resolvable:$true] %s529
      %532 = dma.vmem_to_hbm [thread:$0]  %s530, 16, %s6, [#allocation3]
    $region33: #{quantize_ema_forward.1} parent=1 // pred_fallthru
      _
    // Predicated region
    $region34: #{quantize_ema_forward.1} parent=1 // pred_check
      _
    $region35: #{quantize_ema_forward.1} parent=1 // pred_check_branch
      %534 = sbr.rel (0) target = $region37
    $region36: #{quantize_ema_forward.1} parent=1 // pred_region
      _
    $region37: #{quantize_ema_forward.1} parent=1 // pred_fallthru
      _
    // Predicated region
    $region38: #{quantize_ema_forward.1} parent=1 // pred_check
      _
    $region39: #{quantize_ema_forward.1} parent=1 // pred_check_branch
      %536 = sbr.rel (0) target = $region41
    $region40: #{quantize_ema_forward.1} parent=1 // pred_region
      _
    $region41: #{quantize_ema_forward.1} parent=1 // pred_fallthru
      _
    // Predicated region
    $region42: #{quantize_ema_forward.1} parent=1 // pred_check
      _
    $region43: #{quantize_ema_forward.1} parent=1 // pred_check_branch
      %538 = sbr.rel (0) target = $region45
    $region44: #{quantize_ema_forward.1} parent=1 // pred_region
      %539 = dma.done [#allocation3], 16
    $region45: #{quantize_ema_forward.1} parent=1 // pred_fallthru
      _
    %540 = vsyncpa [#allocation3], 1

</llo_original>
